<compile_context>
chip_gen: v7x
topology: tpu7x:2x2x1
jax: 0.10.0
libtpu: 0.0.40
codegen_flags: <defaults>
</compile_context>

<pallas_src>
import math
import functools

import jax
import jax.numpy as jnp
from jax import lax
from jax.experimental import pallas as pl
from jax.experimental.pallas import tpu as pltpu


# ----------------------------------------------------------------------------- helpers

def _pick_tile(n, cap, mult=8):
    """Largest divisor of n that is <= cap and (a multiple of `mult` or == n)."""
    for t in range(min(n, cap), 0, -1):
        if n % t == 0 and (t % mult == 0 or t == n):
            return t
    return n


def _vmem_limit_bytes():
    """~3/4 of physical VMEM (v5e/v6e: 128 MiB, v7x: 64 MiB), capped at 100 MiB."""
    try:
        cap = int(pltpu.get_tpu_info().vmem_capacity_bytes)
    except Exception:
        cap = 64 * 1024 * 1024                      # conservative fallback (v7x-sized)
    return max(32 * 1024 * 1024, min(cap * 3 // 4, 100 * 1024 * 1024))


def _default_tile_caps():
    """(TQ cap, TK cap): 256-wide MXU chips (v6e/v7x) want wide TK; 128-wide MXUs (v5e and
    older) keep TK=128 and take a larger TQ for more K/V reuse per byte."""
    kind = ""
    try:
        kind = jax.devices()[0].device_kind.lower()
    except Exception:
        pass
    if ("v6" in kind) or ("v7" in kind):
        return 128, 256
    return 256, 128


# ----------------------------------------------------------------------------- kernel 1: fused QKV projection

def _qkv_proj_kernel(x_ref, w_ref, b_ref, q_ref, k_ref, v_ref,
                     *, num_heads, head_dim, k_tile):
    H = num_heads * head_dim
    x = x_ref[0]                                                      # (TS, H)
    # Single fused (TS,H)x(H,3H) matmul, f32 accumulation.  1/sqrt(hd) already folded into Wq/bq.
    qkv = jnp.dot(x, w_ref[...], preferred_element_type=jnp.float32) + b_ref[...]
    n_chunks = k_ref.shape[1]                                         # TS // TK
    for h in range(num_heads):                                        # static, small
        q_ref[0, h] = qkv[:, h * head_dim:(h + 1) * head_dim].astype(q_ref.dtype)
        v_ref[0, h] = qkv[:, 2 * H + h * head_dim:2 * H + (h + 1) * head_dim].astype(v_ref.dtype)
        # K is emitted pre-transposed (hd, seq) and packed per key tile so kernel 2's QK^T is a
        # plain (TQ,hd)x(hd,TK) MXU matmul and each band tile is one contiguous DMA.
        kh_t = jnp.transpose(qkv[:, H + h * head_dim:H + (h + 1) * head_dim], (1, 0))  # (hd, TS)
        for c in range(n_chunks):
            k_ref[0, c, h] = kh_t[:, c * k_tile:(c + 1) * k_tile].astype(k_ref.dtype)


# ----------------------------------------------------------------------------- kernel 2: banded attention

def _banded_attn_kernel(q_ref, k_ref, v_ref, kb_ref, mq_ref, o_ref,
                        m_scr, l_scr, acc_scr,
                        *, num_heads, head_dim, window,
                        q_tile, k_tile, n_lo, nkb, nkt):
    qi = pl.program_id(1)
    kt = pl.program_id(2)
    kb = (qi * q_tile) // k_tile - n_lo + kt           # intended (unclamped) key-tile index

    NEG = jnp.float32(-1e30)                           # band sentinel (exp underflows to 0)

    # ---- init accumulators at the first key-band step
    @pl.when(kt == 0)
    def _init():
        m_scr[...] = jnp.full_like(m_scr, NEG)
        l_scr[...] = jnp.zeros_like(l_scr)
        acc_scr[...] = jnp.zeros_like(acc_scr)

    # ---- skip "phantom" band tiles that fall entirely outside the sequence
    is_real = jnp.logical_and(kb >= 0, kb < nkb)

    @pl.when(is_real)
    def _compute():
        # Band + key mask folded into ONE additive bias tile, hoisted out of the head loop.
        q_start = qi * q_tile
        k_start = kb * k_tile
        qpos = q_start + lax.broadcasted_iota(jnp.int32, (q_tile, k_tile), 0)
        kpos = k_start + lax.broadcasted_iota(jnp.int32, (q_tile, k_tile), 1)
        in_band = jnp.abs(qpos - kpos) <= window                       # (TQ, TK)
        bias = jnp.where(in_band, kb_ref[0, 0], NEG)                   # (TQ, TK) f32

        for h in range(num_heads):                                     # static, small head count
            qh = q_ref[0, h]                                           # (TQ, hd)
            kh = k_ref[0, 0, h]                                        # (hd, TK) pre-transposed
            vh = v_ref[0, h]                                           # (TK, hd)

            s = jnp.dot(qh, kh, preferred_element_type=jnp.float32) + bias   # (TQ, TK)

            # Online (flash-style) softmax update, all f32.
            m_prev = m_scr[h]                                          # (TQ, 1)
            m_new = jnp.maximum(m_prev, jnp.max(s, axis=-1, keepdims=True))
            alpha = jnp.exp(m_prev - m_new)
            p = jnp.exp(s - m_new)
            l_scr[h] = alpha * l_scr[h] + jnp.sum(p, axis=-1, keepdims=True)
            acc_scr[h] = alpha * acc_scr[h] + jnp.dot(
                p.astype(vh.dtype), vh, preferred_element_type=jnp.float32)
            m_scr[h] = m_new

    # ---- finalize: exact 1/l, zero masked query rows, one lane-dense (TQ, H) store
    @pl.when(kt == nkt - 1)
    def _finalize():
        # Query-row mask arrives lane-dense (1, TQ); one small transpose to a (TQ, 1) column.
        qmask_col = jnp.transpose(mq_ref[0, 0], (1, 0)) < 0.0          # (TQ, 1)
        outs = []
        for h in range(num_heads):
            inv = jnp.where(qmask_col, 0.0, 1.0 / l_scr[h])            # exact divide, once/head
            outs.append((acc_scr[h] * inv).astype(o_ref.dtype))
        o_ref[0] = jnp.concatenate(outs, axis=-1)                      # full-width store


# ----------------------------------------------------------------------------- wrapper

def longbert_self_attention(hidden_states, attention_mask, params,
                            *, num_heads, attention_window,
                            q_tile=None, k_tile=None, proj_tile=None):
    """Forward pass of LongBertSelfAttention (no global tokens, eval mode).

    Precondition (documented instead of a host-syncing assert): attention_mask has no
    positive entries (no global-attention tokens).
    """
    B, S, H = hidden_states.shape
    head_dim = H // num_heads
    assert head_dim * num_heads == H
    w = attention_window // 2                                          # one-sided window
    dtype = hidden_states.dtype

    wq, wk, wv, bq, bk, bv = params

    # ---------------- generation-aware tiling / VMEM budget ----------------
    tq_cap, tk_cap = _default_tile_caps()
    vmem_cap = _vmem_limit_bytes()

    TQ = q_tile if q_tile is not None else _pick_tile(S, tq_cap)
    TK = k_tile if k_tile is not None else _pick_tile(S, tk_cap)
    assert S % TQ == 0 and (TQ % 8 == 0 or TQ == S), "query tile must divide S (mult of 8)"
    assert S % TK == 0 and (TK % 8 == 0 or TK == S), "key tile must divide S (mult of 8)"
    nqt, nkb = S // TQ, S // TK

    n_lo = -(-w // TK) if w > 0 else 0                                 # ceil(w / TK)
    if TQ % TK == 0:
        n_hi = (TQ - 1 + w) // TK
    else:  # conservative bound when TQ is not TK-aligned; extra tiles are band-masked (harmless)
        n_hi = (TQ + TK - 2 + w) // TK
    nkt = n_lo + n_hi + 1                                              # band tiles per query tile

    if proj_tile is not None:
        TS = proj_tile
    else:
        TS = TK * _pick_tile(S // TK, max(1, 512 // TK), mult=1)       # big tile, multiple of TK
    assert S % TS == 0 and TS % TK == 0

    # ---------------- kernel 1: fused QKV projection ----------------
    inv_scale = 1.0 / math.sqrt(head_dim)
    wqkv = jnp.concatenate([wq * inv_scale, wk, wv], axis=1)           # (H, 3H), scale folded
    bqkv = jnp.concatenate([bq * inv_scale, bk, bv]).reshape(1, 3 * H)

    proj_kernel = functools.partial(_qkv_proj_kernel, num_heads=num_heads,
                                    head_dim=head_dim, k_tile=TK)
    q, k_t, v = pl.pallas_call(
        proj_kernel,
        out_shape=[
            jax.ShapeDtypeStruct((B, num_heads, S, head_dim), dtype),          # Q head-major
            jax.ShapeDtypeStruct((B, nkb, num_heads, head_dim, TK), dtype),    # K^T packed/tile
            jax.ShapeDtypeStruct((B, num_heads, S, head_dim), dtype),          # V head-major
        ],
        grid=(B, S // TS),
        in_specs=[
            pl.BlockSpec((1, TS, H), lambda b, i: (b, i, 0)),          # hidden_states tile
            # Constant index_map -> weights/bias fetched once and stay resident.
            pl.BlockSpec((H, 3 * H), lambda b, i: (0, 0)),             # fused Wqkv
            pl.BlockSpec((1, 3 * H), lambda b, i: (0, 0)),             # fused bias
        ],
        out_specs=[
            pl.BlockSpec((1, num_heads, TS, head_dim), lambda b, i: (b, 0, i, 0)),
            pl.BlockSpec((1, TS // TK, num_heads, head_dim, TK), lambda b, i: (b, i, 0, 0, 0)),
            pl.BlockSpec((1, num_heads, TS, head_dim), lambda b, i: (b, 0, i, 0)),
        ],
        compiler_params=pltpu.CompilerParams(
            dimension_semantics=("parallel", "parallel"),
            vmem_limit_bytes=vmem_cap),
    )(hidden_states, wqkv, bqkv)

    # ---------------- kernel 2: banded attention ----------------
    mask2d = attention_mask.reshape(B, S).astype(jnp.float32)
    # Key mask precomputed as an additive float bias (HF adds finfo.min to masked keys).
    key_bias = jnp.where(mask2d != 0.0, jnp.finfo(jnp.float32).min, 0.0)
    key_bias_t = key_bias.reshape(B, nkb, 1, TK)                       # lane-dense per key tile
    mask_q_t = mask2d.reshape(B, nqt, 1, TQ)                           # lane-dense per query tile

    def _kb(qi, kt):
        return jnp.clip((qi * TQ) // TK - n_lo + kt, 0, nkb - 1)

    attn_kernel = functools.partial(
        _banded_attn_kernel,
        num_heads=num_heads, head_dim=head_dim, window=w,
        q_tile=TQ, k_tile=TK, n_lo=n_lo, nkb=nkb, nkt=nkt)

    out = pl.pallas_call(
        attn_kernel,
        out_shape=jax.ShapeDtypeStruct((B, S, H), dtype),
        grid=(B, nqt, nkt),
        in_specs=[
            pl.BlockSpec((1, num_heads, TQ, head_dim),
                         lambda b, qi, kt: (b, 0, qi, 0)),                       # Q (resident)
            pl.BlockSpec((1, 1, num_heads, head_dim, TK),
                         lambda b, qi, kt: (b, _kb(qi, kt), 0, 0, 0)),           # K^T band tile
            pl.BlockSpec((1, num_heads, TK, head_dim),
                         lambda b, qi, kt: (b, 0, _kb(qi, kt), 0)),              # V band tile
            pl.BlockSpec((1, 1, 1, TK),
                         lambda b, qi, kt: (b, _kb(qi, kt), 0, 0)),              # key bias tile
            pl.BlockSpec((1, 1, 1, TQ),
                         lambda b, qi, kt: (b, qi, 0, 0)),                       # query mask row
        ],
        out_specs=pl.BlockSpec((1, TQ, H), lambda b, qi, kt: (b, qi, 0)),
        scratch_shapes=[
            pltpu.VMEM((num_heads, TQ, 1), jnp.float32),               # running max  m
            pltpu.VMEM((num_heads, TQ, 1), jnp.float32),               # running sum  l
            pltpu.VMEM((num_heads, TQ, head_dim), jnp.float32),        # output accumulator
        ],
        compiler_params=pltpu.CompilerParams(
            dimension_semantics=("parallel", "parallel", "arbitrary"),
            vmem_limit_bytes=vmem_cap),
    )(q, k_t, v, key_bias_t, mask_q_t)

    return out


# ----------------------------------------------------------------------------- pure-JAX reference

def _reference(hidden_states, attention_mask, params, num_heads, attention_window):
    B, S, H = hidden_states.shape
    hd = H // num_heads
    w = attention_window // 2
    wq, wk, wv, bq, bk, bv = params
    q = (hidden_states @ wq + bq) / math.sqrt(hd)
    k = hidden_states @ wk + bk
    v = hidden_states @ wv + bv
    qh = q.reshape(B, S, num_heads, hd)
    kh = k.reshape(B, S, num_heads, hd)
    vh = v.reshape(B, S, num_heads, hd)
    s = jnp.einsum('bqhd,bkhd->bhqk', qh, kh)
    ii = jnp.arange(S)[:, None]
    jj = jnp.arange(S)[None, :]
    band = jnp.abs(ii - jj) <= w
    s = jnp.where(band[None, None], s, -jnp.inf)
    key_rm = attention_mask != 0
    s = s + jnp.where(key_rm, jnp.finfo(jnp.float32).min, 0.0)[:, None, None, :]
    p = jax.nn.softmax(s, axis=-1)
    p = jnp.where((attention_mask < 0)[:, None, :, None], 0.0, p)
    out = jnp.einsum('bhqk,bkhd->bqhd', p, vh)
    return out.reshape(B, S, H)


# ----------------------------------------------------------------------------- demo

if __name__ == "__main__":
    # Small config consistent with the module: hidden=32, heads=4, seq=16, batch=2,
    # attention_window=8 (one-sided window of 4).  q_tile=k_tile=8 -> 2 query tiles x 3 band
    # tiles, exercising the clamped / phantom band-tile logic at both sequence boundaries.
    B, S, H = 2, 16, 32
    NUM_HEADS = 4
    ATTN_WINDOW = 8

    key = jax.random.PRNGKey(0)
    kx, kq, kk, kv, kbq, kbk, kbv = jax.random.split(key, 7)

    hidden_states = jax.random.normal(kx, (B, S, H), dtype=jnp.float32)

    scale = 0.02
    params = (
        scale * jax.random.normal(kq, (H, H), dtype=jnp.float32),
        scale * jax.random.normal(kk, (H, H), dtype=jnp.float32),
        scale * jax.random.normal(kv, (H, H), dtype=jnp.float32),
        scale * jax.random.normal(kbq, (H,), dtype=jnp.float32),
        scale * jax.random.normal(kbk, (H,), dtype=jnp.float32),
        scale * jax.random.normal(kbv, (H,), dtype=jnp.float32),
    )

    # attention_mask: 0 = local attention, negative = padded/masked, no global tokens.
    attention_mask = jnp.zeros((B, S), dtype=jnp.float32)
    attention_mask = attention_mask.at[1, -2:].set(-10000.0)

    out = longbert_self_attention(hidden_states, attention_mask, params,
                                  num_heads=NUM_HEADS, attention_window=ATTN_WINDOW,
                                  q_tile=8, k_tile=8)
    out = jax.block_until_ready(out)

    ref = _reference(hidden_states, attention_mask, params, NUM_HEADS, ATTN_WINDOW)
    assert out.shape == (B, S, H)
    assert jnp.allclose(out, ref, atol=2e-3, rtol=2e-3), "kernel does not match reference"

    print("KERNEL_OK")
</pallas_src>

<mosaic_0001>
module attributes {stable_mosaic.version = 11 : i64} {
  func.func @_qkv_proj_kernel(%arg0: i32, %arg1: i32, %arg2: memref<1x16x32xf32, #tpu.memory_space<vmem>>, %arg3: memref<32x96xf32, #tpu.memory_space<vmem>>, %arg4: memref<1x96xf32, #tpu.memory_space<vmem>>, %arg5: memref<1x4x16x8xf32, #tpu.memory_space<vmem>>, %arg6: memref<1x2x4x8x8xf32, #tpu.memory_space<vmem>>, %arg7: memref<1x4x16x8xf32, #tpu.memory_space<vmem>>) attributes {dimension_semantics = [#tpu.dimension_semantics<parallel>, #tpu.dimension_semantics<parallel>], iteration_bounds = array<i64: 2, 1>, scalar_prefetch = 0 : i64, scratch_operands = 0 : i64, tpu.core_type = #tpu.core_type<tc>, window_params = [{transform_indices = @transform_0, window_bounds = array<i64: 1, 16, 32>}, {pipeline_mode = #tpu.pipeline_mode<synchronous>, transform_indices = @transform_1, window_bounds = array<i64: 32, 96>}, {pipeline_mode = #tpu.pipeline_mode<synchronous>, transform_indices = @transform_2, window_bounds = array<i64: 1, 96>}, {transform_indices = @transform_3, window_bounds = array<i64: 1, 4, 16, 8>}, {transform_indices = @transform_4, window_bounds = array<i64: 1, 2, 4, 8, 8>}, {transform_indices = @transform_5, window_bounds = array<i64: 1, 4, 16, 8>}]} {
    %c0 = arith.constant 0 : index
    %c0_0 = arith.constant 0 : index
    %c0_1 = arith.constant 0 : index
    %0 = vector.load %arg2[%c0, %c0_0, %c0_1] : memref<1x16x32xf32, #tpu.memory_space<vmem>>, vector<1x16x32xf32>
    %1 = vector.shape_cast %0 : vector<1x16x32xf32> to vector<16x32xf32>
    %c0_2 = arith.constant 0 : index
    %c0_3 = arith.constant 0 : index
    %2 = vector.load %arg3[%c0_2, %c0_3] : memref<32x96xf32, #tpu.memory_space<vmem>>, vector<32x96xf32>
    %cst = arith.constant dense<0.000000e+00> : vector<16x96xf32>
    %3 = tpu.matmul %1, %2, %cst {dimension_numbers = #tpu.dot_dimension_numbers<[1], [0], [0], [1], [0, 0, 1, 1], [], []>} : vector<16x32xf32>, vector<32x96xf32>, vector<16x96xf32> -> vector<16x96xf32>
    %c0_4 = arith.constant 0 : index
    %c0_5 = arith.constant 0 : index
    %4 = vector.load %arg4[%c0_4, %c0_5] : memref<1x96xf32, #tpu.memory_space<vmem>>, vector<1x96xf32>
    %5 = vector.broadcast %4 : vector<1x96xf32> to vector<16x96xf32>
    %6 = arith.addf %3, %5 : vector<16x96xf32>
    %7 = vector.extract_strided_slice %6 {offsets = [0, 0], sizes = [16, 8], strides = [1, 1]} : vector<16x96xf32> to vector<16x8xf32>
    %c0_6 = arith.constant 0 : index
    %c0_7 = arith.constant 0 : index
    %c0_8 = arith.constant 0 : index
    %c0_9 = arith.constant 0 : index
    %8 = vector.load %arg5[%c0_6, %c0_7, %c0_8, %c0_9] : memref<1x4x16x8xf32, #tpu.memory_space<vmem>>, vector<1x1x16x8xf32>
    %9 = vector.shape_cast %8 : vector<1x1x16x8xf32> to vector<16x8xf32>
    %10 = vector.shape_cast %7 : vector<16x8xf32> to vector<1x1x16x8xf32>
    tpu.vector_store %arg5[%c0_6, %c0_7, %c0_8, %c0_9], %10 {strides = array<i32>} : memref<1x4x16x8xf32, #tpu.memory_space<vmem>>, vector<1x1x16x8xf32>,
    %11 = vector.extract_strided_slice %6 {offsets = [0, 64], sizes = [16, 8], strides = [1, 1]} : vector<16x96xf32> to vector<16x8xf32>
    %c0_10 = arith.constant 0 : index
    %c0_11 = arith.constant 0 : index
    %c0_12 = arith.constant 0 : index
    %c0_13 = arith.constant 0 : index
    %12 = vector.load %arg7[%c0_10, %c0_11, %c0_12, %c0_13] : memref<1x4x16x8xf32, #tpu.memory_space<vmem>>, vector<1x1x16x8xf32>
    %13 = vector.shape_cast %12 : vector<1x1x16x8xf32> to vector<16x8xf32>
    %14 = vector.shape_cast %11 : vector<16x8xf32> to vector<1x1x16x8xf32>
    tpu.vector_store %arg7[%c0_10, %c0_11, %c0_12, %c0_13], %14 {strides = array<i32>} : memref<1x4x16x8xf32, #tpu.memory_space<vmem>>, vector<1x1x16x8xf32>,
    %15 = vector.extract_strided_slice %6 {offsets = [0, 32], sizes = [16, 8], strides = [1, 1]} : vector<16x96xf32> to vector<16x8xf32>
    %16 = tpu.transpose %15, [1, 0] : vector<16x8xf32> -> vector<8x16xf32>
    %17 = vector.extract_strided_slice %16 {offsets = [0, 0], sizes = [8, 8], strides = [1, 1]} : vector<8x16xf32> to vector<8x8xf32>
    %c0_14 = arith.constant 0 : index
    %c0_15 = arith.constant 0 : index
    %c0_16 = arith.constant 0 : index
    %c0_17 = arith.constant 0 : index
    %c0_18 = arith.constant 0 : index
    %18 = vector.load %arg6[%c0_14, %c0_15, %c0_16, %c0_17, %c0_18] : memref<1x2x4x8x8xf32, #tpu.memory_space<vmem>>, vector<1x1x1x8x8xf32>
    %19 = vector.shape_cast %18 : vector<1x1x1x8x8xf32> to vector<8x8xf32>
    %20 = vector.shape_cast %17 : vector<8x8xf32> to vector<1x1x1x8x8xf32>
    tpu.vector_store %arg6[%c0_14, %c0_15, %c0_16, %c0_17, %c0_18], %20 {strides = array<i32>} : memref<1x2x4x8x8xf32, #tpu.memory_space<vmem>>, vector<1x1x1x8x8xf32>,
    %21 = vector.extract_strided_slice %16 {offsets = [0, 8], sizes = [8, 8], strides = [1, 1]} : vector<8x16xf32> to vector<8x8xf32>
    %c0_19 = arith.constant 0 : index
    %c1 = arith.constant 1 : index
    %c0_20 = arith.constant 0 : index
    %c0_21 = arith.constant 0 : index
    %c0_22 = arith.constant 0 : index
    %22 = vector.load %arg6[%c0_19, %c1, %c0_20, %c0_21, %c0_22] : memref<1x2x4x8x8xf32, #tpu.memory_space<vmem>>, vector<1x1x1x8x8xf32>
    %23 = vector.shape_cast %22 : vector<1x1x1x8x8xf32> to vector<8x8xf32>
    %24 = vector.shape_cast %21 : vector<8x8xf32> to vector<1x1x1x8x8xf32>
    tpu.vector_store %arg6[%c0_19, %c1, %c0_20, %c0_21, %c0_22], %24 {strides = array<i32>} : memref<1x2x4x8x8xf32, #tpu.memory_space<vmem>>, vector<1x1x1x8x8xf32>,
    %25 = vector.extract_strided_slice %6 {offsets = [0, 8], sizes = [16, 8], strides = [1, 1]} : vector<16x96xf32> to vector<16x8xf32>
    %c0_23 = arith.constant 0 : index
    %c1_24 = arith.constant 1 : index
    %c0_25 = arith.constant 0 : index
    %c0_26 = arith.constant 0 : index
    %26 = vector.load %arg5[%c0_23, %c1_24, %c0_25, %c0_26] : memref<1x4x16x8xf32, #tpu.memory_space<vmem>>, vector<1x1x16x8xf32>
    %27 = vector.shape_cast %26 : vector<1x1x16x8xf32> to vector<16x8xf32>
    %28 = vector.shape_cast %25 : vector<16x8xf32> to vector<1x1x16x8xf32>
    tpu.vector_store %arg5[%c0_23, %c1_24, %c0_25, %c0_26], %28 {strides = array<i32>} : memref<1x4x16x8xf32, #tpu.memory_space<vmem>>, vector<1x1x16x8xf32>,
    %29 = vector.extract_strided_slice %6 {offsets = [0, 72], sizes = [16, 8], strides = [1, 1]} : vector<16x96xf32> to vector<16x8xf32>
    %c0_27 = arith.constant 0 : index
    %c1_28 = arith.constant 1 : index
    %c0_29 = arith.constant 0 : index
    %c0_30 = arith.constant 0 : index
    %30 = vector.load %arg7[%c0_27, %c1_28, %c0_29, %c0_30] : memref<1x4x16x8xf32, #tpu.memory_space<vmem>>, vector<1x1x16x8xf32>
    %31 = vector.shape_cast %30 : vector<1x1x16x8xf32> to vector<16x8xf32>
    %32 = vector.shape_cast %29 : vector<16x8xf32> to vector<1x1x16x8xf32>
    tpu.vector_store %arg7[%c0_27, %c1_28, %c0_29, %c0_30], %32 {strides = array<i32>} : memref<1x4x16x8xf32, #tpu.memory_space<vmem>>, vector<1x1x16x8xf32>,
    %33 = vector.extract_strided_slice %6 {offsets = [0, 40], sizes = [16, 8], strides = [1, 1]} : vector<16x96xf32> to vector<16x8xf32>
    %34 = tpu.transpose %33, [1, 0] : vector<16x8xf32> -> vector<8x16xf32>
    %35 = vector.extract_strided_slice %34 {offsets = [0, 0], sizes = [8, 8], strides = [1, 1]} : vector<8x16xf32> to vector<8x8xf32>
    %c0_31 = arith.constant 0 : index
    %c0_32 = arith.constant 0 : index
    %c1_33 = arith.constant 1 : index
    %c0_34 = arith.constant 0 : index
    %c0_35 = arith.constant 0 : index
    %36 = vector.load %arg6[%c0_31, %c0_32, %c1_33, %c0_34, %c0_35] : memref<1x2x4x8x8xf32, #tpu.memory_space<vmem>>, vector<1x1x1x8x8xf32>
    %37 = vector.shape_cast %36 : vector<1x1x1x8x8xf32> to vector<8x8xf32>
    %38 = vector.shape_cast %35 : vector<8x8xf32> to vector<1x1x1x8x8xf32>
    tpu.vector_store %arg6[%c0_31, %c0_32, %c1_33, %c0_34, %c0_35], %38 {strides = array<i32>} : memref<1x2x4x8x8xf32, #tpu.memory_space<vmem>>, vector<1x1x1x8x8xf32>,
    %39 = vector.extract_strided_slice %34 {offsets = [0, 8], sizes = [8, 8], strides = [1, 1]} : vector<8x16xf32> to vector<8x8xf32>
    %c0_36 = arith.constant 0 : index
    %c1_37 = arith.constant 1 : index
    %c1_38 = arith.constant 1 : index
    %c0_39 = arith.constant 0 : index
    %c0_40 = arith.constant 0 : index
    %40 = vector.load %arg6[%c0_36, %c1_37, %c1_38, %c0_39, %c0_40] : memref<1x2x4x8x8xf32, #tpu.memory_space<vmem>>, vector<1x1x1x8x8xf32>
    %41 = vector.shape_cast %40 : vector<1x1x1x8x8xf32> to vector<8x8xf32>
    %42 = vector.shape_cast %39 : vector<8x8xf32> to vector<1x1x1x8x8xf32>
    tpu.vector_store %arg6[%c0_36, %c1_37, %c1_38, %c0_39, %c0_40], %42 {strides = array<i32>} : memref<1x2x4x8x8xf32, #tpu.memory_space<vmem>>, vector<1x1x1x8x8xf32>,
    %43 = vector.extract_strided_slice %6 {offsets = [0, 16], sizes = [16, 8], strides = [1, 1]} : vector<16x96xf32> to vector<16x8xf32>
    %c0_41 = arith.constant 0 : index
    %c2 = arith.constant 2 : index
    %c0_42 = arith.constant 0 : index
    %c0_43 = arith.constant 0 : index
    %44 = vector.load %arg5[%c0_41, %c2, %c0_42, %c0_43] : memref<1x4x16x8xf32, #tpu.memory_space<vmem>>, vector<1x1x16x8xf32>
    %45 = vector.shape_cast %44 : vector<1x1x16x8xf32> to vector<16x8xf32>
    %46 = vector.shape_cast %43 : vector<16x8xf32> to vector<1x1x16x8xf32>
    tpu.vector_store %arg5[%c0_41, %c2, %c0_42, %c0_43], %46 {strides = array<i32>} : memref<1x4x16x8xf32, #tpu.memory_space<vmem>>, vector<1x1x16x8xf32>,
    %47 = vector.extract_strided_slice %6 {offsets = [0, 80], sizes = [16, 8], strides = [1, 1]} : vector<16x96xf32> to vector<16x8xf32>
    %c0_44 = arith.constant 0 : index
    %c2_45 = arith.constant 2 : index
    %c0_46 = arith.constant 0 : index
    %c0_47 = arith.constant 0 : index
    %48 = vector.load %arg7[%c0_44, %c2_45, %c0_46, %c0_47] : memref<1x4x16x8xf32, #tpu.memory_space<vmem>>, vector<1x1x16x8xf32>
    %49 = vector.shape_cast %48 : vector<1x1x16x8xf32> to vector<16x8xf32>
    %50 = vector.shape_cast %47 : vector<16x8xf32> to vector<1x1x16x8xf32>
    tpu.vector_store %arg7[%c0_44, %c2_45, %c0_46, %c0_47], %50 {strides = array<i32>} : memref<1x4x16x8xf32, #tpu.memory_space<vmem>>, vector<1x1x16x8xf32>,
    %51 = vector.extract_strided_slice %6 {offsets = [0, 48], sizes = [16, 8], strides = [1, 1]} : vector<16x96xf32> to vector<16x8xf32>
    %52 = tpu.transpose %51, [1, 0] : vector<16x8xf32> -> vector<8x16xf32>
    %53 = vector.extract_strided_slice %52 {offsets = [0, 0], sizes = [8, 8], strides = [1, 1]} : vector<8x16xf32> to vector<8x8xf32>
    %c0_48 = arith.constant 0 : index
    %c0_49 = arith.constant 0 : index
    %c2_50 = arith.constant 2 : index
    %c0_51 = arith.constant 0 : index
    %c0_52 = arith.constant 0 : index
    %54 = vector.load %arg6[%c0_48, %c0_49, %c2_50, %c0_51, %c0_52] : memref<1x2x4x8x8xf32, #tpu.memory_space<vmem>>, vector<1x1x1x8x8xf32>
    %55 = vector.shape_cast %54 : vector<1x1x1x8x8xf32> to vector<8x8xf32>
    %56 = vector.shape_cast %53 : vector<8x8xf32> to vector<1x1x1x8x8xf32>
    tpu.vector_store %arg6[%c0_48, %c0_49, %c2_50, %c0_51, %c0_52], %56 {strides = array<i32>} : memref<1x2x4x8x8xf32, #tpu.memory_space<vmem>>, vector<1x1x1x8x8xf32>,
    %57 = vector.extract_strided_slice %52 {offsets = [0, 8], sizes = [8, 8], strides = [1, 1]} : vector<8x16xf32> to vector<8x8xf32>
    %c0_53 = arith.constant 0 : index
    %c1_54 = arith.constant 1 : index
    %c2_55 = arith.constant 2 : index
    %c0_56 = arith.constant 0 : index
    %c0_57 = arith.constant 0 : index
    %58 = vector.load %arg6[%c0_53, %c1_54, %c2_55, %c0_56, %c0_57] : memref<1x2x4x8x8xf32, #tpu.memory_space<vmem>>, vector<1x1x1x8x8xf32>
    %59 = vector.shape_cast %58 : vector<1x1x1x8x8xf32> to vector<8x8xf32>
    %60 = vector.shape_cast %57 : vector<8x8xf32> to vector<1x1x1x8x8xf32>
    tpu.vector_store %arg6[%c0_53, %c1_54, %c2_55, %c0_56, %c0_57], %60 {strides = array<i32>} : memref<1x2x4x8x8xf32, #tpu.memory_space<vmem>>, vector<1x1x1x8x8xf32>,
    %61 = vector.extract_strided_slice %6 {offsets = [0, 24], sizes = [16, 8], strides = [1, 1]} : vector<16x96xf32> to vector<16x8xf32>
    %c0_58 = arith.constant 0 : index
    %c3 = arith.constant 3 : index
    %c0_59 = arith.constant 0 : index
    %c0_60 = arith.constant 0 : index
    %62 = vector.load %arg5[%c0_58, %c3, %c0_59, %c0_60] : memref<1x4x16x8xf32, #tpu.memory_space<vmem>>, vector<1x1x16x8xf32>
    %63 = vector.shape_cast %62 : vector<1x1x16x8xf32> to vector<16x8xf32>
    %64 = vector.shape_cast %61 : vector<16x8xf32> to vector<1x1x16x8xf32>
    tpu.vector_store %arg5[%c0_58, %c3, %c0_59, %c0_60], %64 {strides = array<i32>} : memref<1x4x16x8xf32, #tpu.memory_space<vmem>>, vector<1x1x16x8xf32>,
    %65 = vector.extract_strided_slice %6 {offsets = [0, 88], sizes = [16, 8], strides = [1, 1]} : vector<16x96xf32> to vector<16x8xf32>
    %c0_61 = arith.constant 0 : index
    %c3_62 = arith.constant 3 : index
    %c0_63 = arith.constant 0 : index
    %c0_64 = arith.constant 0 : index
    %66 = vector.load %arg7[%c0_61, %c3_62, %c0_63, %c0_64] : memref<1x4x16x8xf32, #tpu.memory_space<vmem>>, vector<1x1x16x8xf32>
    %67 = vector.shape_cast %66 : vector<1x1x16x8xf32> to vector<16x8xf32>
    %68 = vector.shape_cast %65 : vector<16x8xf32> to vector<1x1x16x8xf32>
    tpu.vector_store %arg7[%c0_61, %c3_62, %c0_63, %c0_64], %68 {strides = array<i32>} : memref<1x4x16x8xf32, #tpu.memory_space<vmem>>, vector<1x1x16x8xf32>,
    %69 = vector.extract_strided_slice %6 {offsets = [0, 56], sizes = [16, 8], strides = [1, 1]} : vector<16x96xf32> to vector<16x8xf32>
    %70 = tpu.transpose %69, [1, 0] : vector<16x8xf32> -> vector<8x16xf32>
    %71 = vector.extract_strided_slice %70 {offsets = [0, 0], sizes = [8, 8], strides = [1, 1]} : vector<8x16xf32> to vector<8x8xf32>
    %c0_65 = arith.constant 0 : index
    %c0_66 = arith.constant 0 : index
    %c3_67 = arith.constant 3 : index
    %c0_68 = arith.constant 0 : index
    %c0_69 = arith.constant 0 : index
    %72 = vector.load %arg6[%c0_65, %c0_66, %c3_67, %c0_68, %c0_69] : memref<1x2x4x8x8xf32, #tpu.memory_space<vmem>>, vector<1x1x1x8x8xf32>
    %73 = vector.shape_cast %72 : vector<1x1x1x8x8xf32> to vector<8x8xf32>
    %74 = vector.shape_cast %71 : vector<8x8xf32> to vector<1x1x1x8x8xf32>
    tpu.vector_store %arg6[%c0_65, %c0_66, %c3_67, %c0_68, %c0_69], %74 {strides = array<i32>} : memref<1x2x4x8x8xf32, #tpu.memory_space<vmem>>, vector<1x1x1x8x8xf32>,
    %75 = vector.extract_strided_slice %70 {offsets = [0, 8], sizes = [8, 8], strides = [1, 1]} : vector<8x16xf32> to vector<8x8xf32>
    %c0_70 = arith.constant 0 : index
    %c1_71 = arith.constant 1 : index
    %c3_72 = arith.constant 3 : index
    %c0_73 = arith.constant 0 : index
    %c0_74 = arith.constant 0 : index
    %76 = vector.load %arg6[%c0_70, %c1_71, %c3_72, %c0_73, %c0_74] : memref<1x2x4x8x8xf32, #tpu.memory_space<vmem>>, vector<1x1x1x8x8xf32>
    %77 = vector.shape_cast %76 : vector<1x1x1x8x8xf32> to vector<8x8xf32>
    %78 = vector.shape_cast %75 : vector<8x8xf32> to vector<1x1x1x8x8xf32>
    tpu.vector_store %arg6[%c0_70, %c1_71, %c3_72, %c0_73, %c0_74], %78 {strides = array<i32>} : memref<1x2x4x8x8xf32, #tpu.memory_space<vmem>>, vector<1x1x1x8x8xf32>,
    return
  }
  func.func @transform_0(%arg0: i32, %arg1: i32) -> (i32, i32, i32) {
    %c0_i32 = arith.constant 0 : i32
    %c0_i32_0 = arith.constant 0 : i32
    return %arg0, %arg1, %c0_i32 : i32, i32, i32
  }
  func.func @transform_1(%arg0: i32, %arg1: i32) -> (i32, i32) {
    %c0_i32 = arith.constant 0 : i32
    %c0_i32_0 = arith.constant 0 : i32
    %c0_i32_1 = arith.constant 0 : i32
    return %c0_i32, %c0_i32_0 : i32, i32
  }
  func.func @transform_2(%arg0: i32, %arg1: i32) -> (i32, i32) {
    %c0_i32 = arith.constant 0 : i32
    %c0_i32_0 = arith.constant 0 : i32
    %c0_i32_1 = arith.constant 0 : i32
    return %c0_i32, %c0_i32_0 : i32, i32
  }
  func.func @transform_3(%arg0: i32, %arg1: i32) -> (i32, i32, i32, i32) {
    %c0_i32 = arith.constant 0 : i32
    %c0_i32_0 = arith.constant 0 : i32
    %c0_i32_1 = arith.constant 0 : i32
    return %arg0, %c0_i32, %arg1, %c0_i32_0 : i32, i32, i32, i32
  }
  func.func @transform_4(%arg0: i32, %arg1: i32) -> (i32, i32, i32, i32, i32) {
    %c0_i32 = arith.constant 0 : i32
    %c0_i32_0 = arith.constant 0 : i32
    %c0_i32_1 = arith.constant 0 : i32
    %c0_i32_2 = arith.constant 0 : i32
    return %arg0, %arg1, %c0_i32, %c0_i32_0, %c0_i32_1 : i32, i32, i32, i32, i32
  }
  func.func @transform_5(%arg0: i32, %arg1: i32) -> (i32, i32, i32, i32) {
    %c0_i32 = arith.constant 0 : i32
    %c0_i32_0 = arith.constant 0 : i32
    %c0_i32_1 = arith.constant 0 : i32
    return %arg0, %c0_i32, %arg1, %c0_i32_0 : i32, i32, i32, i32
  }
}

</mosaic_0001>

<llo_original>
// kernel: tpu_custom_call.1
$region0: #{tpu_custom_call.1}
  #allocation0 [shape = 'u32[]', space=smem, size = 0x4, offset = 0x4, fixed_abs, tag = 'smem constant byte address 0x4 - core index']
  #allocation1 [shape = 'u32[144,128]{1,0:T(1,128)}', space=vmem, size = 0x12000, scoped, tag = 'internal scratch']
  %s0 = inlined_call_operand.hbm [shape: f32[2,16,32], index: 0, kind: input, shape index: {}]
  %s1 = inlined_call_operand.hbm [shape: f32[32,96], index: 1, kind: input, shape index: {}]
  %s2 = inlined_call_operand.vmem [shape: f32[1,96], index: 2, kind: input, shape index: {}]
  %s3 = inlined_call_operand.vmem [shape: f32[2,4,16,8], index: 3, kind: output, shape index: {0}]
  %s4 = inlined_call_operand.hbm [shape: f32[2,2,4,8,8], index: 4, kind: output, shape index: {1}]
  %s5 = inlined_call_operand.vmem [shape: f32[2,4,16,8], index: 5, kind: output, shape index: {2}]
  %6 = xla_tuple %s3, %s4, %s5
  %s7 = sld [smem:[#allocation0]]
  $region69: #{tpu_custom_call.1} parent=0
    _
  %s9 = ssub.s32 1, %s7
  %s10 = scalar_select 0, %s9, %s7
  $region1: #{tpu_custom_call.1} parent=0
    #allocation2 [shape = 'u8[16384]{0}', space=vmem, size = 0x4000, scoped, tag = 'input window, operand 0']
    #allocation3 [shape = 's32[2]{0}', space=sflag, size = 0x8, scoped, tag = 'scoped memory for tpu_custom_call.1']
    #allocation4 [shape = 's32[2]{0}', space=sflag, size = 0x8, scoped, tag = 'scoped memory for tpu_custom_call.1']
    #allocation5 [shape = 'u8[16384]{0}', space=vmem, size = 0x4000, scoped, tag = 'input window, operand 1, single buffered']
    #allocation6 [shape = 's32[1]{0}', space=sflag, size = 0x4, scoped, tag = 'scoped memory for tpu_custom_call.1']
    #allocation7 [shape = 'u8[65536]{0}', space=vmem, size = 0x10000, scoped, tag = 'output window, operand 1']
    %11 = vsyncpa [#allocation3], 0
    %s12 = scalar_lea.sflag [#allocation3], 1
    %13 = vsyncpa %s12, 0
    %14 = vsyncpa [#allocation6], 0
    %15 = vsyncpa [#allocation4], 0
    %s16 = scalar_lea.sflag [#allocation4], 1
    %17 = vsyncpa %s16, 0
    loop: start=0, step=1, limit=4
    $region2: #{tpu_custom_call.1} parent=1 // loop_pre_header
      _
    $region3: #{tpu_custom_call.1} parent=1 // loop_header
      %s19 = sphi 0, %s23
      %p20 = scmp.ge.s32.totalorder %s19, 4
      %s26 = sphi 0, %s38
      %s27 = sphi 0, %s34
      %s28 = sphi 0, %s26
      %s29 = sphi 0, %s27
      %s30 = sphi 0, %s28
      %s31 = sphi 0, %s29
      %s43 = sphi 0, %s45
      %s46 = sphi 0, %s43
      %s47 = sphi 0, %s46
      %s63 = sphi 0, %s47
      %s67 = sphi 0, %s67
      %s69 = sphi 0, %s67
      %s70 = sphi 0, %s69
      %s84 = sphi 0, %s70
      %s88 = sphi 0, %s88
      %s90 = sphi 0, %s88
      %s91 = sphi 0, %s90
      %s105 = sphi 0, %s91
      %s113 = sphi 0, %s115
      %s116 = sphi 0, %s113
      %s117 = sphi 0, %s116
      %s133 = sphi 0, %s117
      %s141 = sphi 0, %s143
      %s144 = sphi 0, %s141
      %s145 = sphi 0, %s144
      %s161 = sphi 0, %s145
      %s169 = sphi 0, %s171
      %s172 = sphi 0, %s169
      %s173 = sphi 0, %s172
      %s189 = sphi 0, %s173
    $region4: #{tpu_custom_call.1} parent=1 // loop_header_branch
      %22 = sbr.rel (%p20) target = $region8
    $region5: #{tpu_custom_call.1} parent=1 // loop_body
      %s24 = ssub.s32 %s19, 1
      %s25 = ssub.s32 %s19, 2
      %s32 = sadd.s32 1, %s27
      %p33 = scmp.ge.s32.totalorder %s32, 1
      %s34 = scalar_select %p33, 0, %s32
      %s35 = sadd.s32 1, %s26
      %s36 = scalar_select %p33, %s35, %s26
      %p37 = scmp.ge.s32.totalorder %s36, 2
      %s38 = scalar_select %p37, 0, %s36
      %s39 = ssub.s32 %s26, %s38
      %s40 = ssub.s32 %s27, %s34
      %s41 = sor.u32 %s39, %s40
      %p42 = scmp.eq.s32.totalorder %s41, 0
      %s44 = sadd.s32 %s43, 1
      %s45 = scalar_select %p42, %s43, %s44
      %p48 = pneg %p42
      %p49 = scmp.eq.s32.totalorder %s19, 1
      %p50 = por %p48, %p49
      %p51 = scmp.ne.s32.totalorder %s43, %s46
      %p52 = scmp.eq.s32.totalorder %s19, 0
      %p53 = por %p51, %p52
      %p54 = scmp.ne.s32.totalorder %s43, %s46
      %p55 = scmp.eq.s32.totalorder %s24, 1
      %p56 = por %p54, %p55
      %p57 = scmp.ne.s32.totalorder %s46, %s47
      %p58 = scmp.eq.s32.totalorder %s24, 0
      %p59 = por %p57, %p58
      %p60 = scmp.ne.s32.totalorder %s46, %s47
      %p61 = scmp.eq.s32.totalorder %s25, 1
      %p62 = por %p60, %p61
      %p64 = scmp.ne.s32.totalorder %s47, %s63
      %p65 = scmp.eq.s32.totalorder %s25, 0
      %p66 = por %p64, %p65
      %s68 = sadd.s32 %s67, 1
      %p71 = scmp.eq.s32.totalorder %s19, 1
      %p72 = scmp.ne.s32.totalorder %s67, %s69
      %p73 = scmp.eq.s32.totalorder %s19, 0
      %p74 = por %p72, %p73
      %p75 = scmp.ne.s32.totalorder %s67, %s69
      %p76 = scmp.eq.s32.totalorder %s24, 1
      %p77 = por %p75, %p76
      %p78 = scmp.ne.s32.totalorder %s69, %s70
      %p79 = scmp.eq.s32.totalorder %s24, 0
      %p80 = por %p78, %p79
      %p81 = scmp.ne.s32.totalorder %s69, %s70
      %p82 = scmp.eq.s32.totalorder %s25, 1
      %p83 = por %p81, %p82
      %p85 = scmp.ne.s32.totalorder %s70, %s84
      %p86 = scmp.eq.s32.totalorder %s25, 0
      %p87 = por %p85, %p86
      %s89 = sadd.s32 %s88, 1
      %p92 = scmp.eq.s32.totalorder %s19, 1
      %p93 = scmp.ne.s32.totalorder %s88, %s90
      %p94 = scmp.eq.s32.totalorder %s19, 0
      %p95 = por %p93, %p94
      %p96 = scmp.ne.s32.totalorder %s88, %s90
      %p97 = scmp.eq.s32.totalorder %s24, 1
      %p98 = por %p96, %p97
      %p99 = scmp.ne.s32.totalorder %s90, %s91
      %p100 = scmp.eq.s32.totalorder %s24, 0
      %p101 = por %p99, %p100
      %p102 = scmp.ne.s32.totalorder %s90, %s91
      %p103 = scmp.eq.s32.totalorder %s25, 1
      %p104 = por %p102, %p103
      %p106 = scmp.ne.s32.totalorder %s91, %s105
      %p107 = scmp.eq.s32.totalorder %s25, 0
      %p108 = por %p106, %p107
      %s109 = ssub.s32 %s26, %s38
      %s110 = ssub.s32 %s27, %s34
      %s111 = sor.u32 %s109, %s110
      %p112 = scmp.eq.s32.totalorder %s111, 0
      %s114 = sadd.s32 %s113, 1
      %s115 = scalar_select %p112, %s113, %s114
      %p118 = pneg %p112
      %p119 = scmp.eq.s32.totalorder %s19, 1
      %p120 = por %p118, %p119
      %p121 = scmp.ne.s32.totalorder %s113, %s116
      %p122 = scmp.eq.s32.totalorder %s19, 0
      %p123 = por %p121, %p122
      %p124 = scmp.ne.s32.totalorder %s113, %s116
      %p125 = scmp.eq.s32.totalorder %s24, 1
      %p126 = por %p124, %p125
      %p127 = scmp.ne.s32.totalorder %s116, %s117
      %p128 = scmp.eq.s32.totalorder %s24, 0
      %p129 = por %p127, %p128
      %p130 = scmp.ne.s32.totalorder %s116, %s117
      %p131 = scmp.eq.s32.totalorder %s25, 1
      %p132 = por %p130, %p131
      %p134 = scmp.ne.s32.totalorder %s117, %s133
      %p135 = scmp.eq.s32.totalorder %s25, 0
      %p136 = por %p134, %p135
      %s137 = ssub.s32 %s26, %s38
      %s138 = ssub.s32 %s27, %s34
      %s139 = sor.u32 %s137, %s138
      %p140 = scmp.eq.s32.totalorder %s139, 0
      %s142 = sadd.s32 %s141, 1
      %s143 = scalar_select %p140, %s141, %s142
      %p146 = pneg %p140
      %p147 = scmp.eq.s32.totalorder %s19, 1
      %p148 = por %p146, %p147
      %p149 = scmp.ne.s32.totalorder %s141, %s144
      %p150 = scmp.eq.s32.totalorder %s19, 0
      %p151 = por %p149, %p150
      %p152 = scmp.ne.s32.totalorder %s141, %s144
      %p153 = scmp.eq.s32.totalorder %s24, 1
      %p154 = por %p152, %p153
      %p155 = scmp.ne.s32.totalorder %s144, %s145
      %p156 = scmp.eq.s32.totalorder %s24, 0
      %p157 = por %p155, %p156
      %p158 = scmp.ne.s32.totalorder %s144, %s145
      %p159 = scmp.eq.s32.totalorder %s25, 1
      %p160 = por %p158, %p159
      %p162 = scmp.ne.s32.totalorder %s145, %s161
      %p163 = scmp.eq.s32.totalorder %s25, 0
      %p164 = por %p162, %p163
      %s165 = ssub.s32 %s26, %s38
      %s166 = ssub.s32 %s27, %s34
      %s167 = sor.u32 %s165, %s166
      %p168 = scmp.eq.s32.totalorder %s167, 0
      %s170 = sadd.s32 %s169, 1
      %s171 = scalar_select %p168, %s169, %s170
      %p174 = pneg %p168
      %p175 = scmp.eq.s32.totalorder %s19, 1
      %p176 = por %p174, %p175
      %p177 = scmp.ne.s32.totalorder %s169, %s172
      %p178 = scmp.eq.s32.totalorder %s19, 0
      %p179 = por %p177, %p178
      %p180 = scmp.ne.s32.totalorder %s169, %s172
      %p181 = scmp.eq.s32.totalorder %s24, 1
      %p182 = por %p180, %p181
      %p183 = scmp.ne.s32.totalorder %s172, %s173
      %p184 = scmp.eq.s32.totalorder %s24, 0
      %p185 = por %p183, %p184
      %p186 = scmp.ne.s32.totalorder %s172, %s173
      %p187 = scmp.eq.s32.totalorder %s25, 1
      %p188 = por %p186, %p187
      %p190 = scmp.ne.s32.totalorder %s173, %s189
      %p191 = scmp.eq.s32.totalorder %s25, 0
      %p192 = por %p190, %p191
      %p193 = scmp.le.s32.totalorder 1, %s19
      %p194 = scmp.lt.s32.totalorder %s19, 3
      %p195 = pnand %p193, %p194
      %p196 = pneg %p195
      // Predicated region
      $region9: #{tpu_custom_call.1} parent=5 // pred_check
        _
      $region10: #{tpu_custom_call.1} parent=5 // pred_check_branch
        %198 = sbr.rel (%p195) target = $region12
      $region11: #{tpu_custom_call.1} parent=5 // pred_region
        %s199 = ssub.s32 %s19, 1
        // Predicated region
        $region13: #{tpu_custom_call.1} parent=11 // pred_check
          %p200 = pneg %p80
        $region14: #{tpu_custom_call.1} parent=11 // pred_check_branch
          %202 = sbr.rel (%p200) target = $region16
        $region15: #{tpu_custom_call.1} parent=11 // pred_region
          %s204 = ssub.s32 512, 512
          %205 = vsyncadd [#allocation6], %s204
          %s206 = sshll.u32 [#allocation5], 4
          %s207 = int_to_ptr.vmem [resolvable:$true] %s206
          %212 = dma.hbm_to_vmem [thread:$0]  %s1, 512, %s207, [#allocation6], 128, 128, 8
        $region16: #{tpu_custom_call.1} parent=11 // pred_fallthru
          _
        // Predicated region
        $region17: #{tpu_custom_call.1} parent=11 // pred_check
          %p213 = pneg %p101
        $region18: #{tpu_custom_call.1} parent=11 // pred_check_branch
          %215 = sbr.rel (%p213) target = $region20
        $region19: #{tpu_custom_call.1} parent=11 // pred_region
          _
        $region20: #{tpu_custom_call.1} parent=11 // pred_fallthru
          _
      $region12: #{tpu_custom_call.1} parent=5 // pred_fallthru
        _
      %p216 = scmp.lt.s32.totalorder %s19, 2
      // Predicated region
      $region21: #{tpu_custom_call.1} parent=5 // pred_check
        %p217 = pneg %p216
      $region22: #{tpu_custom_call.1} parent=5 // pred_check_branch
        %219 = sbr.rel (%p217) target = $region24
      $region23: #{tpu_custom_call.1} parent=5 // pred_region
        // Predicated region
        $region25: #{tpu_custom_call.1} parent=23 // pred_check
          %p220 = pneg %p53
        $region26: #{tpu_custom_call.1} parent=23 // pred_check_branch
          %222 = sbr.rel (%p220) target = $region28
        $region27: #{tpu_custom_call.1} parent=23 // pred_region
          %s223 = sand.u32 %s43, 1
          %s224 = scalar_lea.sflag [#allocation3], %s223
          %s225 = sand.u32 %s43, 1
          %s226 = smul.addr %s225, 16
          %s227 = scalar_lea.vmem [#allocation2], %s226
          %s228 = smul.u32 2, %s27
          %s230 = ssub.s32 256, 256
          %231 = vsyncadd %s224, %s230
          %s232 = smul.addr %s26, 2
          %s233 = sadd.s32 %s228, %s232
          %s234 = smul.addr %s233, 128
          %s235 = scalar_lea.hbm %s0, %s234
          %s236 = sshll.u32 %s227, 4
          %s237 = int_to_ptr.vmem [resolvable:$true] %s236
          %242 = dma.hbm_to_vmem [thread:$0]  %s235, 256, %s237, %s224, 128, 128, 8
        $region28: #{tpu_custom_call.1} parent=23 // pred_fallthru
          _
      $region24: #{tpu_custom_call.1} parent=5 // pred_fallthru
        _
      %p243 = scmp.le.s32.totalorder 1, %s19
      %p244 = scmp.lt.s32.totalorder %s19, 3
      %p245 = pnand %p243, %p244
      %p246 = pneg %p245
      // Predicated region
      $region29: #{tpu_custom_call.1} parent=5 // pred_check
        _
      $region30: #{tpu_custom_call.1} parent=5 // pred_check_branch
        %248 = sbr.rel (%p245) target = $region32
      $region31: #{tpu_custom_call.1} parent=5 // pred_region
        %s249 = ssub.s32 %s19, 1
        %s250 = sand.u32 %s46, 1
        %s251 = scalar_lea.sflag [#allocation3], %s250
        %s252 = sand.u32 %s46, 1
        %s253 = smul.addr %s252, 16
        %s254 = scalar_lea.vmem [#allocation2], %s253
        // Predicated region
        $region33: #{tpu_custom_call.1} parent=31 // pred_check
          %p255 = pneg %p59
        $region34: #{tpu_custom_call.1} parent=31 // pred_check_branch
          %257 = sbr.rel (%p255) target = $region36
        $region35: #{tpu_custom_call.1} parent=31 // pred_region
          %258 = dma.done %s251, 256
        $region36: #{tpu_custom_call.1} parent=31 // pred_fallthru
          _
        // Predicated region
        $region37: #{tpu_custom_call.1} parent=31 // pred_check
          %p259 = pneg %p80
        $region38: #{tpu_custom_call.1} parent=31 // pred_check_branch
          %261 = sbr.rel (%p259) target = $region40
        $region39: #{tpu_custom_call.1} parent=31 // pred_region
          %262 = dma.done [#allocation6], 512
        $region40: #{tpu_custom_call.1} parent=31 // pred_fallthru
          _
        %s263 = sand.u32 %s46, 1
        %s264 = scalar_lea.sflag [#allocation3], %s263
        %s265 = sand.u32 %s46, 1
        %s266 = smul.addr %s265, 16
        %s267 = scalar_lea.vmem [#allocation2], %s266
        %p268 = pneg %p59
        %p269 = pneg %p56
        %p270 = pneg %p80
        %p271 = pneg %p77
        %p272 = pneg %p101
        %p273 = pneg %p98
        %p274 = pneg %p129
        %p275 = pneg %p126
        %s276 = smul.u32 2, %s29
        %p277 = scmp.lt.s32.totalorder %s28, 1
        %s278 = scalar_select %p277, %s28, 1
        %p279 = scmp.lt.s32.totalorder %s276, 1
        %s280 = scalar_select %p279, %s276, 1
        %s281 = smul.addr %s278, 8
        %s282 = sadd.s32 %s280, %s281
        %s283 = smul.addr %s282, 8
        %s284 = scalar_lea.vmem %s3, %s283
        %p285 = pneg %p157
        %p286 = pneg %p154
        %s287 = sand.u32 %s144, 1
        %s288 = scalar_lea.sflag [#allocation4], %s287
        %s289 = sand.u32 %s144, 1
        %s290 = smul.addr %s289, 64
        %s291 = scalar_lea.vmem [#allocation7], %s290
        %p292 = pneg %p185
        %p293 = pneg %p182
        %s294 = smul.u32 2, %s29
        %p295 = scmp.lt.s32.totalorder %s28, 1
        %s296 = scalar_select %p295, %s28, 1
        %p297 = scmp.lt.s32.totalorder %s294, 1
        %s298 = scalar_select %p297, %s294, 1
        %s299 = smul.addr %s296, 8
        %s300 = sadd.s32 %s298, %s299
        %s301 = smul.addr %s300, 8
        %s302 = scalar_lea.vmem %s5, %s301
        %s303 = smul.u32 2, %s29
        %s304 = smul.u32 2, %s29
        %p305 = scmp.lt.s32.totalorder %s28, 1
        %s306 = scalar_select %p305, %s28, 1
        %p307 = scmp.lt.s32.totalorder %s304, 1
        %s308 = scalar_select %p307, %s304, 1
        %s309 = smul.addr %s306, 8
        %s310 = sadd.s32 %s308, %s309
        %s311 = smul.addr %s310, 8
        %s312 = scalar_lea.vmem %s3, %s311
        %s313 = smul.u32 2, %s29
        %s314 = smul.u32 2, %s29
        %s315 = smul.u32 2, %s29
        %p316 = scmp.lt.s32.totalorder %s28, 1
        %s317 = scalar_select %p316, %s28, 1
        %p318 = scmp.lt.s32.totalorder %s315, 1
        %s319 = scalar_select %p318, %s315, 1
        %s320 = smul.addr %s317, 8
        %s321 = sadd.s32 %s319, %s320
        %s322 = smul.addr %s321, 8
        %s323 = scalar_lea.vmem %s5, %s322
        %s324 = smul.u32 2, %s29
        %v325 = vld [vmem:[%s254] sm:$0xff]
        %v326 = vld [vmem:[%s254 + $0x8] sm:$0xff]
        %v327 = vld [vmem:[#allocation5] sm:$0xff]
        %v328 = vld [vmem:[#allocation5 + $0x8] sm:$0xff]
        %v329 = vld [vmem:[#allocation5 + $0x10] sm:$0xff]
        %v330 = vld [vmem:[#allocation5 + $0x18] sm:$0xff]
        %v331 = vld [vmem:[%s2] sm:$0x1]
        %v333 = vlaneseq
        %v334 = vshrl.u32 %v333, 7
        %v335 = vsub.s32 0, %v334
        %v336 = vrot.slane %v331, %v335
        %vm338 = vcmask 261120
        %v340 = vsel %vm338, %v325, 0
        %v343 = vsel %vm338, %v326, 0
        %345 = vmatprep.subr.mxu0 0.0
        %346 = vmatpush1.msra.mxu0 %v327
        %347 = vmatprep.subr.mxu0 0.0
        %348 = vmatpush1.msra.mxu0 %v328
        %349 = vmatprep.subr.mxu0 0.0
        %350 = vmatpush1.msra.mxu0 %v329
        %351 = vmatprep.subr.mxu0 0.0
        %352 = vmatpush1.msra.mxu0 %v330
        %353 = vmatprep.subr.mxu0 0.0
        %354 = vmatpush1.msra.mxu0 0.0
        %355 = vmatprep.subr.mxu0 0.0
        %356 = vmatpush1.msra.mxu0 0.0
        %357 = vmatprep.subr.mxu0 0.0
        %358 = vmatpush1.msra.mxu0 0.0
        %359 = vmatprep.subr.mxu0 0.0
        %360 = vmatpush1.msra.mxu0 0.0
        %361 = vmatprep.subr.mxu0 0.0
        %362 = vmatpush1.msra.mxu0 0.0
        %363 = vmatprep.subr.mxu0 0.0
        %364 = vmatpush1.msra.mxu0 0.0
        %365 = vmatprep.subr.mxu0 0.0
        %366 = vmatpush1.msra.mxu0 0.0
        %367 = vmatprep.subr.mxu0 0.0
        %368 = vmatpush1.msra.mxu0 0.0
        %369 = vmatprep.subr.mxu0 0.0
        %370 = vmatpush1.msra.mxu0 0.0
        %371 = vmatprep.subr.mxu0 0.0
        %372 = vmatpush1.msra.mxu0 0.0
        %373 = vmatprep.subr.mxu0 0.0
        %374 = vmatpush1.msra.mxu0 0.0
        %375 = vmatprep.subr.mxu0 0.0
        %376 = vmatpush1.msra.mxu0 0.0
        %377 = vmatprep.subr.mxu0 0.0
        %378 = vmatpush1.msra.mxu0 0.0
        %379 = vmatprep.subr.mxu0 0.0
        %380 = vmatpush1.msra.mxu0 0.0
        %381 = vmatprep.subr.mxu0 0.0
        %382 = vmatpush1.msra.mxu0 0.0
        %383 = vmatprep.subr.mxu0 0.0
        %384 = vmatpush1.msra.mxu0 0.0
        %385 = vmatprep.subr.mxu0 0.0
        %386 = vmatpush1.msra.mxu0 0.0
        %387 = vmatprep.subr.mxu0 0.0
        %388 = vmatpush1.msra.mxu0 0.0
        %389 = vmatprep.subr.mxu0 0.0
        %390 = vmatpush1.msra.mxu0 0.0
        %391 = vmatprep.subr.mxu0 0.0
        %392 = vmatpush1.msra.mxu0 0.0
        %393 = vmatprep.subr.mxu0 0.0
        %394 = vmatpush1.msra.mxu0 0.0
        %395 = vmatprep.subr.mxu0 0.0
        %396 = vmatpush1.msra.mxu0 0.0
        %397 = vmatprep.subr.mxu0 0.0
        %398 = vmatpush1.msra.mxu0 0.0
        %399 = vmatprep.subr.mxu0 0.0
        %400 = vmatpush1.msra.mxu0 0.0
        %401 = vmatprep.subr.mxu0 0.0
        %402 = vmatpush1.msra.mxu0 0.0
        %403 = vmatprep.subr.mxu0 0.0
        %404 = vmatpush1.msra.mxu0 0.0
        %405 = vmatprep.subr.mxu0 0.0
        %406 = vmatpush1.msra.mxu0 0.0
        %407 = vmatprep.subr.mxu0 0.0
        %408 = vmatpush1.msra.mxu0 0.0
        %409 = vmatprep.mubr.f32.mxu0 0.0
        %410 = vmatmul.mubr.f32.gmra.mrb[0].mxu0 %v340
        %v411 = vpop.f32.mrb[0].mxu0
        %v412 = vadd.f32 %v336, %v411
        %v413 = vpop.f32.mrb[0].mxu0
        %414 = vmatprep.mubr.f32.mxu0 0.0
        %415 = vmatmul.mubr.f32.gmra.mrb[0].mxu0 %v343
        %v416 = vpop.f32.mrb[0].mxu0
        %v417 = vadd.f32 %v336, %v416
        %v418 = vpop.f32.mrb[0].mxu0
        %419 = vdwg.mxu0
        %vm420 = vcmask 64512
        %421 = vst.msk [vmem:[%s312] sm:$0xff] %vm420, %v412
        %422 = vst.msk [vmem:[%s312 + $0x8] sm:$0xff] %vm420, %v417
        %425 = vrot.lane.b32.xlu0 %v412, 64
        %v426 = vpop.permute.xlu0 %425
        %427 = vrot.lane.b32.xlu0 %v417, 64
        %v428 = vpop.permute.xlu0 %427
        %431 = vst.msk [vmem:[%s323] sm:$0xff] %vm420, %v426
        %432 = vst.msk [vmem:[%s323 + $0x8] sm:$0xff] %vm420, %v428
        %433 = vrot.lane.b32.xlu0 %v412, 96
        %v434 = vpop.permute.xlu0 %433
        %435 = vrot.lane.b32.xlu0 %v417, 96
        %v436 = vpop.permute.xlu0 %435
        %439 = vxpose.xlu0.b32.start [1/16] %v434, 128
        %440 = vxpose.xlu0.b32.cont [2/16] %v436, 128
        %441 = vxpose.xlu0.b32.cont [3/16] 0.0, 128
        %442 = vxpose.xlu0.b32.cont [4/16] 0.0, 128
        %443 = vxpose.xlu0.b32.cont [5/16] 0.0, 128
        %444 = vxpose.xlu0.b32.cont [6/16] 0.0, 128
        %445 = vxpose.xlu0.b32.cont [7/16] 0.0, 128
        %446 = vxpose.xlu0.b32.cont [8/16] 0.0, 128
        %447 = vxpose.xlu0.b32.cont [9/16] 0.0, 128
        %448 = vxpose.xlu0.b32.cont [10/16] 0.0, 128
        %449 = vxpose.xlu0.b32.cont [11/16] 0.0, 128
        %450 = vxpose.xlu0.b32.cont [12/16] 0.0, 128
        %451 = vxpose.xlu0.b32.cont [13/16] 0.0, 128
        %452 = vxpose.xlu0.b32.cont [14/16] 0.0, 128
        %453 = vxpose.xlu0.b32.cont [15/16] 0.0, 128
        %454 = vxpose.xlu0.b32.end [16/16] 0.0, 128
        %v455 = vpop.trf.xlu0
        %v456 = vpop.trf.xlu0
        %v457 = vpop.trf.xlu0
        %v458 = vpop.trf.xlu0
        %v459 = vpop.trf.xlu0
        %v460 = vpop.trf.xlu0
        %v461 = vpop.trf.xlu0
        %v462 = vpop.trf.xlu0
        %v463 = vpop.trf.xlu0
        %v464 = vpop.trf.xlu0
        %v465 = vpop.trf.xlu0
        %v466 = vpop.trf.xlu0
        %v467 = vpop.trf.xlu0
        %v468 = vpop.trf.xlu0
        %v469 = vpop.trf.xlu0
        %v470 = vpop.trf.xlu0
        %471 = vst.msk [vmem:[%s291] sm:$0xff] %vm420, %v455
        %473 = vrot.lane.b32.xlu0 %v455, 120
        %v474 = vpop.permute.xlu0 %473
        %s476 = scalar_lea.vmem %s291, 32 [#allocation7]
        %477 = vst.msk [vmem:[%s476] sm:$0xff] %vm420, %v474
        %478 = vrot.lane.b32.xlu0 %v412, 120
        %v479 = vpop.permute.xlu0 %478
        %480 = vrot.lane.b32.xlu0 %v417, 120
        %v481 = vpop.permute.xlu0 %480
        %s484 = scalar_lea.vmem %s312, 16
        %485 = vst.msk [vmem:[%s484] sm:$0xff] %vm420, %v479
        %486 = vst.msk [vmem:[%s484 + $0x8] sm:$0xff] %vm420, %v481
        %487 = vrot.lane.b32.xlu0 %v412, 56
        %v488 = vpop.permute.xlu0 %487
        %489 = vrot.lane.b32.xlu0 %v417, 56
        %v490 = vpop.permute.xlu0 %489
        %s493 = scalar_lea.vmem %s323, 16
        %494 = vst.msk [vmem:[%s493] sm:$0xff] %vm420, %v488
        %495 = vst.msk [vmem:[%s493 + $0x8] sm:$0xff] %vm420, %v490
        %496 = vrot.lane.b32.xlu0 %v412, 88
        %v497 = vpop.permute.xlu0 %496
        %498 = vrot.lane.b32.xlu0 %v417, 88
        %v499 = vpop.permute.xlu0 %498
        %502 = vxpose.xlu0.b32.start [1/16] %v497, 128
        %503 = vxpose.xlu0.b32.cont [2/16] %v499, 128
        %504 = vxpose.xlu0.b32.cont [3/16] 0.0, 128
        %505 = vxpose.xlu0.b32.cont [4/16] 0.0, 128
        %506 = vxpose.xlu0.b32.cont [5/16] 0.0, 128
        %507 = vxpose.xlu0.b32.cont [6/16] 0.0, 128
        %508 = vxpose.xlu0.b32.cont [7/16] 0.0, 128
        %509 = vxpose.xlu0.b32.cont [8/16] 0.0, 128
        %510 = vxpose.xlu0.b32.cont [9/16] 0.0, 128
        %511 = vxpose.xlu0.b32.cont [10/16] 0.0, 128
        %512 = vxpose.xlu0.b32.cont [11/16] 0.0, 128
        %513 = vxpose.xlu0.b32.cont [12/16] 0.0, 128
        %514 = vxpose.xlu0.b32.cont [13/16] 0.0, 128
        %515 = vxpose.xlu0.b32.cont [14/16] 0.0, 128
        %516 = vxpose.xlu0.b32.cont [15/16] 0.0, 128
        %517 = vxpose.xlu0.b32.end [16/16] 0.0, 128
        %v518 = vpop.trf.xlu0
        %v519 = vpop.trf.xlu0
        %v520 = vpop.trf.xlu0
        %v521 = vpop.trf.xlu0
        %v522 = vpop.trf.xlu0
        %v523 = vpop.trf.xlu0
        %v524 = vpop.trf.xlu0
        %v525 = vpop.trf.xlu0
        %v526 = vpop.trf.xlu0
        %v527 = vpop.trf.xlu0
        %v528 = vpop.trf.xlu0
        %v529 = vpop.trf.xlu0
        %v530 = vpop.trf.xlu0
        %v531 = vpop.trf.xlu0
        %v532 = vpop.trf.xlu0
        %v533 = vpop.trf.xlu0
        %s534 = scalar_lea.vmem %s291, 8 [#allocation7]
        %535 = vst.msk [vmem:[%s534] sm:$0xff] %vm420, %v518
        %537 = vrot.lane.b32.xlu0 %v518, 120
        %v538 = vpop.permute.xlu0 %537
        %s540 = scalar_lea.vmem %s291, 40 [#allocation7]
        %541 = vst.msk [vmem:[%s540] sm:$0xff] %vm420, %v538
        %542 = vrot.lane.b32.xlu0 %v412, 112
        %v543 = vpop.permute.xlu0 %542
        %544 = vrot.lane.b32.xlu0 %v417, 112
        %v545 = vpop.permute.xlu0 %544
        %s548 = scalar_lea.vmem %s312, 32
        %549 = vst.msk [vmem:[%s548] sm:$0xff] %vm420, %v543
        %550 = vst.msk [vmem:[%s548 + $0x8] sm:$0xff] %vm420, %v545
        %551 = vrot.lane.b32.xlu0 %v412, 48
        %v552 = vpop.permute.xlu0 %551
        %553 = vrot.lane.b32.xlu0 %v417, 48
        %v554 = vpop.permute.xlu0 %553
        %s557 = scalar_lea.vmem %s323, 32
        %558 = vst.msk [vmem:[%s557] sm:$0xff] %vm420, %v552
        %559 = vst.msk [vmem:[%s557 + $0x8] sm:$0xff] %vm420, %v554
        %560 = vrot.lane.b32.xlu0 %v412, 80
        %v561 = vpop.permute.xlu0 %560
        %562 = vrot.lane.b32.xlu0 %v417, 80
        %v563 = vpop.permute.xlu0 %562
        %566 = vxpose.xlu0.b32.start [1/16] %v561, 128
        %567 = vxpose.xlu0.b32.cont [2/16] %v563, 128
        %568 = vxpose.xlu0.b32.cont [3/16] 0.0, 128
        %569 = vxpose.xlu0.b32.cont [4/16] 0.0, 128
        %570 = vxpose.xlu0.b32.cont [5/16] 0.0, 128
        %571 = vxpose.xlu0.b32.cont [6/16] 0.0, 128
        %572 = vxpose.xlu0.b32.cont [7/16] 0.0, 128
        %573 = vxpose.xlu0.b32.cont [8/16] 0.0, 128
        %574 = vxpose.xlu0.b32.cont [9/16] 0.0, 128
        %575 = vxpose.xlu0.b32.cont [10/16] 0.0, 128
        %576 = vxpose.xlu0.b32.cont [11/16] 0.0, 128
        %577 = vxpose.xlu0.b32.cont [12/16] 0.0, 128
        %578 = vxpose.xlu0.b32.cont [13/16] 0.0, 128
        %579 = vxpose.xlu0.b32.cont [14/16] 0.0, 128
        %580 = vxpose.xlu0.b32.cont [15/16] 0.0, 128
        %581 = vxpose.xlu0.b32.end [16/16] 0.0, 128
        %v582 = vpop.trf.xlu0
        %v583 = vpop.trf.xlu0
        %v584 = vpop.trf.xlu0
        %v585 = vpop.trf.xlu0
        %v586 = vpop.trf.xlu0
        %v587 = vpop.trf.xlu0
        %v588 = vpop.trf.xlu0
        %v589 = vpop.trf.xlu0
        %v590 = vpop.trf.xlu0
        %v591 = vpop.trf.xlu0
        %v592 = vpop.trf.xlu0
        %v593 = vpop.trf.xlu0
        %v594 = vpop.trf.xlu0
        %v595 = vpop.trf.xlu0
        %v596 = vpop.trf.xlu0
        %v597 = vpop.trf.xlu0
        %s598 = scalar_lea.vmem %s291, 16 [#allocation7]
        %599 = vst.msk [vmem:[%s598] sm:$0xff] %vm420, %v582
        %601 = vrot.lane.b32.xlu0 %v582, 120
        %v602 = vpop.permute.xlu0 %601
        %s604 = scalar_lea.vmem %s291, 48 [#allocation7]
        %605 = vst.msk [vmem:[%s604] sm:$0xff] %vm420, %v602
        %606 = vrot.lane.b32.xlu0 %v412, 104
        %v607 = vpop.permute.xlu0 %606
        %608 = vrot.lane.b32.xlu0 %v417, 104
        %v609 = vpop.permute.xlu0 %608
        %s612 = scalar_lea.vmem %s312, 48
        %613 = vst.msk [vmem:[%s612] sm:$0xff] %vm420, %v607
        %614 = vst.msk [vmem:[%s612 + $0x8] sm:$0xff] %vm420, %v609
        %615 = vrot.lane.b32.xlu0 %v412, 40
        %v616 = vpop.permute.xlu0 %615
        %617 = vrot.lane.b32.xlu0 %v417, 40
        %v618 = vpop.permute.xlu0 %617
        %s621 = scalar_lea.vmem %s323, 48
        %622 = vst.msk [vmem:[%s621] sm:$0xff] %vm420, %v616
        %623 = vst.msk [vmem:[%s621 + $0x8] sm:$0xff] %vm420, %v618
        %624 = vrot.lane.b32.xlu0 %v412, 72
        %v625 = vpop.permute.xlu0 %624
        %626 = vrot.lane.b32.xlu0 %v417, 72
        %v627 = vpop.permute.xlu0 %626
        %630 = vxpose.xlu0.b32.start [1/16] %v625, 128
        %631 = vxpose.xlu0.b32.cont [2/16] %v627, 128
        %632 = vxpose.xlu0.b32.cont [3/16] 0.0, 128
        %633 = vxpose.xlu0.b32.cont [4/16] 0.0, 128
        %634 = vxpose.xlu0.b32.cont [5/16] 0.0, 128
        %635 = vxpose.xlu0.b32.cont [6/16] 0.0, 128
        %636 = vxpose.xlu0.b32.cont [7/16] 0.0, 128
        %637 = vxpose.xlu0.b32.cont [8/16] 0.0, 128
        %638 = vxpose.xlu0.b32.cont [9/16] 0.0, 128
        %639 = vxpose.xlu0.b32.cont [10/16] 0.0, 128
        %640 = vxpose.xlu0.b32.cont [11/16] 0.0, 128
        %641 = vxpose.xlu0.b32.cont [12/16] 0.0, 128
        %642 = vxpose.xlu0.b32.cont [13/16] 0.0, 128
        %643 = vxpose.xlu0.b32.cont [14/16] 0.0, 128
        %644 = vxpose.xlu0.b32.cont [15/16] 0.0, 128
        %645 = vxpose.xlu0.b32.end [16/16] 0.0, 128
        %v646 = vpop.trf.xlu0
        %v647 = vpop.trf.xlu0
        %v648 = vpop.trf.xlu0
        %v649 = vpop.trf.xlu0
        %v650 = vpop.trf.xlu0
        %v651 = vpop.trf.xlu0
        %v652 = vpop.trf.xlu0
        %v653 = vpop.trf.xlu0
        %v654 = vpop.trf.xlu0
        %v655 = vpop.trf.xlu0
        %v656 = vpop.trf.xlu0
        %v657 = vpop.trf.xlu0
        %v658 = vpop.trf.xlu0
        %v659 = vpop.trf.xlu0
        %v660 = vpop.trf.xlu0
        %v661 = vpop.trf.xlu0
        %s662 = scalar_lea.vmem %s291, 24 [#allocation7]
        %663 = vst.msk [vmem:[%s662] sm:$0xff] %vm420, %v646
        %665 = vrot.lane.b32.xlu0 %v646, 120
        %v666 = vpop.permute.xlu0 %665
        %s668 = scalar_lea.vmem %s291, 56 [#allocation7]
        %669 = vst.msk [vmem:[%s668] sm:$0xff] %vm420, %v666
        %s670 = smul.u32 2, %s29
        %p671 = scmp.lt.s32.totalorder %s28, 1
        %s672 = scalar_select %p671, %s28, 1
        %p673 = scmp.lt.s32.totalorder %s670, 1
        %s674 = scalar_select %p673, %s670, 1
        %s675 = smul.addr %s672, 8
        %s676 = sadd.s32 %s674, %s675
        %s677 = smul.addr %s676, 8
        %s678 = scalar_lea.vmem %s3, %s677
        %s679 = sand.u32 %s144, 1
        %s680 = scalar_lea.sflag [#allocation4], %s679
        %s681 = sand.u32 %s144, 1
        %s682 = smul.addr %s681, 64
        %s683 = scalar_lea.vmem [#allocation7], %s682
        %s684 = smul.u32 2, %s29
        %p685 = scmp.lt.s32.totalorder %s28, 1
        %s686 = scalar_select %p685, %s28, 1
        %p687 = scmp.lt.s32.totalorder %s684, 1
        %s688 = scalar_select %p687, %s684, 1
        %s689 = smul.addr %s686, 8
        %s690 = sadd.s32 %s688, %s689
        %s691 = smul.addr %s690, 8
        %s692 = scalar_lea.vmem %s5, %s691
        // Predicated region
        $region41: #{tpu_custom_call.1} parent=31 // pred_check
          %p693 = pneg %p126
        $region42: #{tpu_custom_call.1} parent=31 // pred_check_branch
          %695 = sbr.rel (%p693) target = $region44
        $region43: #{tpu_custom_call.1} parent=31 // pred_region
          %s696 = smul.u32 2, %s29
        $region44: #{tpu_custom_call.1} parent=31 // pred_fallthru
          _
        // Predicated region
        $region45: #{tpu_custom_call.1} parent=31 // pred_check
          %p697 = pneg %p154
        $region46: #{tpu_custom_call.1} parent=31 // pred_check_branch
          %699 = sbr.rel (%p697) target = $region48
        $region47: #{tpu_custom_call.1} parent=31 // pred_region
          %s700 = smul.u32 2, %s29
          %s702 = ssub.s32 1024, 1024
          %703 = vsyncadd %s680, %s702
          %s704 = smul.addr %s700, 4
          %s705 = smul.addr %s28, 8
          %s706 = sadd.s32 %s704, %s705
          %s707 = smul.addr %s706, 128
          %s708 = scalar_lea.hbm %s4, %s707
          %s709 = sshll.u32 %s683, 4
          %s710 = int_to_ptr.vmem [resolvable:$true] %s709
          %715 = dma.vmem_to_hbm [thread:$0]  %s710, 1024, %s708, %s680, 128, 128, 8
        $region48: #{tpu_custom_call.1} parent=31 // pred_fallthru
          _
        // Predicated region
        $region49: #{tpu_custom_call.1} parent=31 // pred_check
          %p716 = pneg %p182
        $region50: #{tpu_custom_call.1} parent=31 // pred_check_branch
          %718 = sbr.rel (%p716) target = $region52
        $region51: #{tpu_custom_call.1} parent=31 // pred_region
          %s719 = smul.u32 2, %s29
        $region52: #{tpu_custom_call.1} parent=31 // pred_fallthru
          _
      $region32: #{tpu_custom_call.1} parent=5 // pred_fallthru
        _
      %p720 = scmp.le.s32.totalorder 2, %s19
      // Predicated region
      $region53: #{tpu_custom_call.1} parent=5 // pred_check
        %p721 = pneg %p720
      $region54: #{tpu_custom_call.1} parent=5 // pred_check_branch
        %723 = sbr.rel (%p721) target = $region56
      $region55: #{tpu_custom_call.1} parent=5 // pred_region
        %s724 = ssub.s32 %s19, 2
        // Predicated region
        $region57: #{tpu_custom_call.1} parent=55 // pred_check
          %p725 = pneg %p132
        $region58: #{tpu_custom_call.1} parent=55 // pred_check_branch
          %727 = sbr.rel (%p725) target = $region60
        $region59: #{tpu_custom_call.1} parent=55 // pred_region
          %s728 = smul.u32 2, %s31
          %p729 = scmp.lt.s32.totalorder %s30, 1
          %s730 = scalar_select %p729, %s30, 1
          %p731 = scmp.lt.s32.totalorder %s728, 1
          %s732 = scalar_select %p731, %s728, 1
          %s733 = smul.addr %s730, 8
          %s734 = sadd.s32 %s732, %s733
          %s735 = smul.addr %s734, 8
          %s736 = scalar_lea.vmem %s3, %s735
        $region60: #{tpu_custom_call.1} parent=55 // pred_fallthru
          _
        // Predicated region
        $region61: #{tpu_custom_call.1} parent=55 // pred_check
          %p737 = pneg %p160
        $region62: #{tpu_custom_call.1} parent=55 // pred_check_branch
          %739 = sbr.rel (%p737) target = $region64
        $region63: #{tpu_custom_call.1} parent=55 // pred_region
          %s740 = sand.u32 %s145, 1
          %s741 = scalar_lea.sflag [#allocation4], %s740
          %s742 = sand.u32 %s145, 1
          %s743 = smul.addr %s742, 64
          %s744 = scalar_lea.vmem [#allocation7], %s743
          %745 = dma.done %s741, 1024
        $region64: #{tpu_custom_call.1} parent=55 // pred_fallthru
          _
        // Predicated region
        $region65: #{tpu_custom_call.1} parent=55 // pred_check
          %p746 = pneg %p188
        $region66: #{tpu_custom_call.1} parent=55 // pred_check_branch
          %748 = sbr.rel (%p746) target = $region68
        $region67: #{tpu_custom_call.1} parent=55 // pred_region
          %s749 = smul.u32 2, %s31
          %p750 = scmp.lt.s32.totalorder %s30, 1
          %s751 = scalar_select %p750, %s30, 1
          %p752 = scmp.lt.s32.totalorder %s749, 1
          %s753 = scalar_select %p752, %s749, 1
          %s754 = smul.addr %s751, 8
          %s755 = sadd.s32 %s753, %s754
          %s756 = smul.addr %s755, 8
          %s757 = scalar_lea.vmem %s5, %s756
        $region68: #{tpu_custom_call.1} parent=55 // pred_fallthru
          _
      $region56: #{tpu_custom_call.1} parent=5 // pred_fallthru
        _
    $region6: #{tpu_custom_call.1} parent=1 // loop_footer
      %s23 = sadd.s32 1, %s19
    $region7: #{tpu_custom_call.1} parent=1 // loop_footer_branch
      %18 = sbr.rel target = $region3
    $region8: #{tpu_custom_call.1} parent=1 // loop_exit
      _
    %758 = vsyncpa [#allocation3], 1
    %s759 = scalar_lea.sflag [#allocation3], 1
    %760 = vsyncpa %s759, 1
    %761 = vsyncpa [#allocation6], 1
    %762 = vsyncpa [#allocation4], 1
    %s763 = scalar_lea.sflag [#allocation4], 1
    %764 = vsyncpa %s763, 1

</llo_original>
